<compile_context>
chip_gen: v6e
topology: v6e:2x2x1
jax: 0.10.0
libtpu: 0.0.40
codegen_flags: <defaults>
</compile_context>

<pallas_src>
import jax
import jax.numpy as jnp
from jax.experimental import pallas as pl
from jax.experimental.pallas import tpu as pltpu


# ---------------------------------------------------------------------------
# Fused Pallas kernel: conv1 -> ReLU -> (dropout=id) -> conv2(+lin1 folded)
#                      -> global mean pool
# ---------------------------------------------------------------------------
def _fused_net_kernel(aq_ref, xw_ref, w2_ref, c_ref, o_ref):
    n = aq_ref.shape[1]           # number of nodes (static)
    b = o_ref.shape[0]            # number of graphs (static)

    aq = aq_ref[...]              # [N + 2B, N]: rows = [A ; P@A ; P]
    a = aq[:n, :]                 # [N, N]   adjacency (A[i,j]=1 for edge j->i)
    q = aq[n:, :]                 # [2B, N]  stacked (P@A, P) pooling rows

    xw = xw_ref[...]              # [2N, H]: rows = [X@W1_rel ; X@W1_root + b1]
    xr = xw[:n, :]                # [N, H]
    xt = xw[n:, :]                # [N, H]

    # conv1 + ReLU.  (F.dropout in eval mode is the identity.)
    h = jnp.maximum(
        jnp.dot(a, xr, preferred_element_type=jnp.float32) + xt, 0.0)   # [N, H]

    # conv2 with lin1 folded in:
    #   hw[:, 0] = H @ (W2_rel @ W_lin),  hw[:, 1] = H @ (W2_root @ W_lin)
    hw = jnp.dot(h, w2_ref[...], preferred_element_type=jnp.float32)    # [N, 2]

    # remaining aggregation + mean pool + lin1, all in one matmul:
    #   out = (P@A) @ hw[:, 0] + P @ hw[:, 1] + (b2 @ W_lin + b_lin)
    qhw = jnp.dot(q, hw, preferred_element_type=jnp.float32)            # [2B, 2]
    out = qhw[:b, 0:1] + qhw[b:, 1:2] + c_ref[0]                        # [B, 1]
    o_ref[...] = out.astype(o_ref.dtype)


def _full_spec(shape):
    # Single grid point: each operand's block is the whole array (exempt from
    # the (8,128) divisibility rule since block_shape == array shape).
    return pl.BlockSpec(shape, lambda: (0,) * len(shape))


def _net_forward(params, x, edge_index, batch, num_graphs):
    """Mirrors Net.forward (eval mode): one fused Pallas kernel under jit."""
    f32 = jnp.float32
    N = x.shape[0]

    # --- glue (fused by jit): dense adjacency, A[i, j] = 1 for edge j -> i ---
    src, dst = edge_index[0], edge_index[1]
    A = jnp.zeros((N, N), f32).at[dst, src].add(1.0)

    # --- glue: mean-pool matrix P [B, N] and its aggregated form P@A ---
    one_hot = jax.nn.one_hot(batch, num_graphs, dtype=f32)          # [N, B]
    counts = jnp.maximum(one_hot.sum(axis=0), 1.0)                  # [B]
    P = (one_hot / counts[None, :]).T                               # [B, N]
    PA = P @ A                                                      # [B, N]

    # --- weight / input prep: conv1 projections (exact: A@(X@W) == (A@X)@W) ---
    xf = x.astype(f32)
    XR = xf @ params["conv1_w_rel"]                                 # [N, H]
    XT = xf @ params["conv1_w_root"] + params["conv1_b"]            # [N, H]

    # --- weight prep: fold lin1 into conv2 (exact, no nonlinearity between) ---
    w2r = params["conv2_w_rel"] @ params["lin1_w"]                  # [H, 1]
    w2t = params["conv2_w_root"] @ params["lin1_w"]                 # [H, 1]
    W2 = jnp.concatenate([w2r, w2t], axis=1)                        # [H, 2]
    c = (params["conv2_b"] @ params["lin1_w"]
         + params["lin1_b"]).reshape(1).astype(f32)                 # [1]

    # --- pack operands into slabs: 3 VMEM operands + 1 SMEM scalar ---
    slab_aq = jnp.concatenate([A, PA, P], axis=0)                   # [N+2B, N]
    slab_xw = jnp.concatenate([XR, XT], axis=0)                     # [2N, H]

    out = pl.pallas_call(
        _fused_net_kernel,
        out_shape=jax.ShapeDtypeStruct((num_graphs, 1), f32),
        in_specs=[
            _full_spec(slab_aq.shape),
            _full_spec(slab_xw.shape),
            _full_spec(W2.shape),
            pl.BlockSpec(memory_space=pltpu.MemorySpace.SMEM),
        ],
        out_specs=_full_spec((num_graphs, 1)),
    )(slab_aq, slab_xw, W2, c)
    return out[:, 0]  # .squeeze(1)


net_forward = jax.jit(_net_forward, static_argnames=("num_graphs",))


# ---------------------------------------------------------------------------
# Pure-JAX reference (straight transcription of the PyTorch forward, eval mode)
# ---------------------------------------------------------------------------
def _reference_forward(params, x, edge_index, batch, num_graphs):
    N = x.shape[0]
    src, dst = edge_index[0], edge_index[1]
    A = jnp.zeros((N, N), jnp.float32).at[dst, src].add(1.0)
    h = jax.nn.relu(A @ x @ params["conv1_w_rel"]
                    + x @ params["conv1_w_root"] + params["conv1_b"])
    h2 = (A @ h @ params["conv2_w_rel"]
          + h @ params["conv2_w_root"] + params["conv2_b"])
    one_hot = jax.nn.one_hot(batch, num_graphs, dtype=jnp.float32)   # [N, B]
    counts = jnp.maximum(one_hot.sum(axis=0), 1.0)                   # [B]
    pooled = (one_hot.T @ h2) / counts[:, None]                      # [B, H]
    return (pooled @ params["lin1_w"] + params["lin1_b"])[:, 0]


# ---------------------------------------------------------------------------
# Parameter setup (mirroring GraphConv / Linear init conventions)
# ---------------------------------------------------------------------------
def init_params(num_features, hidden=16, key=jax.random.PRNGKey(0)):
    k = jax.random.split(key, 6)

    def lin_w(key, fan_in, fan_out):
        bound = 1.0 / jnp.sqrt(fan_in)
        # stored as [fan_in, fan_out] so that X @ W matches torch's x @ W.T
        return jax.random.uniform(key, (fan_in, fan_out), jnp.float32,
                                  -bound, bound)

    return {
        # conv1 = GraphConv(num_features, 16)
        "conv1_w_rel": lin_w(k[0], num_features, hidden),
        "conv1_w_root": lin_w(k[1], num_features, hidden),
        "conv1_b": jnp.zeros((hidden,), jnp.float32),
        # conv2 = GraphConv(16, 16)
        "conv2_w_rel": lin_w(k[2], hidden, hidden),
        "conv2_w_root": lin_w(k[3], hidden, hidden),
        "conv2_b": jnp.zeros((hidden,), jnp.float32),
        # lin1 = Linear(16, 1)
        "lin1_w": lin_w(k[4], hidden, 1),
        "lin1_b": jax.random.uniform(k[5], (1,), jnp.float32,
                                     -1.0 / jnp.sqrt(hidden),
                                     1.0 / jnp.sqrt(hidden)),
    }


# ---------------------------------------------------------------------------
if __name__ == "__main__":
    key = jax.random.PRNGKey(0)
    num_features = 4
    num_nodes = 16          # 2 graphs, 8 nodes each
    num_graphs = 2

    # Deterministic node features.
    x = jax.random.normal(key, (num_nodes, num_features), jnp.float32)

    # Deterministic edges: a ring inside each graph (both directions).
    src_list, dst_list = [], []
    for g in range(num_graphs):
        base = g * 8
        for i in range(8):
            a, b = base + i, base + (i + 1) % 8
            src_list += [a, b]
            dst_list += [b, a]
    edge_index = jnp.array([src_list, dst_list], dtype=jnp.int32)    # [2, E]

    batch = jnp.array([0] * 8 + [1] * 8, dtype=jnp.int32)            # [N]

    params = init_params(num_features)

    out = net_forward(params, x, edge_index, batch, num_graphs=num_graphs)
    jax.block_until_ready(out)
    assert out.shape == (num_graphs,)

    ref = _reference_forward(params, x, edge_index, batch, num_graphs)
    assert bool(jnp.allclose(out, ref, atol=1e-3, rtol=1e-3)), (out, ref)

    print("KERNEL_OK")
</pallas_src>

<mosaic_0001>
module attributes {stable_mosaic.version = 11 : i64} {
  func.func private @main(%arg0: i32) attributes {dimension_semantics = [#tpu.dimension_semantics<core_parallel>], iteration_bounds = array<i64: 2>, tpu.core_type = #tpu.core_type<sc_scalar_subcore>, window_params = []} {
    return
  }
}

module attributes {stable_mosaic.version = 11 : i64} {
  func.func private @main(%arg0: i32) attributes {dimension_semantics = [#tpu.dimension_semantics<core_parallel>], iteration_bounds = array<i64: 2>, tpu.core_type = #tpu.core_type<sc_scalar_subcore>, window_params = []} {
    return
  }
}

module attributes {stable_mosaic.version = 11 : i64} {
  func.func @_fused_net_kernel(%arg0: memref<20x16xf32, #tpu.memory_space<vmem>>, %arg1: memref<32x16xf32, #tpu.memory_space<vmem>>, %arg2: memref<16x2xf32, #tpu.memory_space<vmem>>, %arg3: memref<1xf32, #tpu.memory_space<smem>>, %arg4: memref<2x1xf32, #tpu.memory_space<vmem>>) attributes {dimension_semantics = [], scalar_prefetch = 0 : i64, scratch_operands = 0 : i64, tpu.core_type = #tpu.core_type<tc>} {
    %c0 = arith.constant 0 : index
    %c0_0 = arith.constant 0 : index
    %0 = vector.load %arg0[%c0, %c0_0] : memref<20x16xf32, #tpu.memory_space<vmem>>, vector<20x16xf32>
    %1 = vector.extract_strided_slice %0 {offsets = [0, 0], sizes = [16, 16], strides = [1, 1]} : vector<20x16xf32> to vector<16x16xf32>
    %2 = vector.extract_strided_slice %0 {offsets = [16, 0], sizes = [4, 16], strides = [1, 1]} : vector<20x16xf32> to vector<4x16xf32>
    %c0_1 = arith.constant 0 : index
    %c0_2 = arith.constant 0 : index
    %3 = vector.load %arg1[%c0_1, %c0_2] : memref<32x16xf32, #tpu.memory_space<vmem>>, vector<32x16xf32>
    %4 = vector.extract_strided_slice %3 {offsets = [0, 0], sizes = [16, 16], strides = [1, 1]} : vector<32x16xf32> to vector<16x16xf32>
    %5 = vector.extract_strided_slice %3 {offsets = [16, 0], sizes = [16, 16], strides = [1, 1]} : vector<32x16xf32> to vector<16x16xf32>
    %cst = arith.constant dense<0.000000e+00> : vector<16x16xf32>
    %6 = tpu.matmul %1, %4, %cst {dimension_numbers = #tpu.dot_dimension_numbers<[1], [0], [0], [1], [0, 0, 1, 1], [], []>} : vector<16x16xf32>, vector<16x16xf32>, vector<16x16xf32> -> vector<16x16xf32>
    %7 = arith.addf %6, %5 : vector<16x16xf32>
    %cst_3 = arith.constant 0.000000e+00 : f32
    %8 = vector.broadcast %cst_3 : f32 to vector<16x16xf32>
    %9 = arith.maximumf %7, %8 : vector<16x16xf32>
    %c0_4 = arith.constant 0 : index
    %c0_5 = arith.constant 0 : index
    %10 = vector.load %arg2[%c0_4, %c0_5] : memref<16x2xf32, #tpu.memory_space<vmem>>, vector<16x2xf32>
    %cst_6 = arith.constant dense<0.000000e+00> : vector<16x2xf32>
    %11 = tpu.matmul %9, %10, %cst_6 {dimension_numbers = #tpu.dot_dimension_numbers<[1], [0], [0], [1], [0, 0, 1, 1], [], []>} : vector<16x16xf32>, vector<16x2xf32>, vector<16x2xf32> -> vector<16x2xf32>
    %cst_7 = arith.constant dense<0.000000e+00> : vector<4x2xf32>
    %12 = tpu.matmul %2, %11, %cst_7 {dimension_numbers = #tpu.dot_dimension_numbers<[1], [0], [0], [1], [0, 0, 1, 1], [], []>} : vector<4x16xf32>, vector<16x2xf32>, vector<4x2xf32> -> vector<4x2xf32>
    %13 = vector.extract_strided_slice %12 {offsets = [0, 0], sizes = [2, 1], strides = [1, 1]} : vector<4x2xf32> to vector<2x1xf32>
    %14 = vector.extract_strided_slice %12 {offsets = [2, 1], sizes = [2, 1], strides = [1, 1]} : vector<4x2xf32> to vector<2x1xf32>
    %15 = arith.addf %13, %14 : vector<2x1xf32>
    %c0_8 = arith.constant 0 : index
    %16 = memref.load %arg3[%c0_8] : memref<1xf32, #tpu.memory_space<smem>>
    %17 = vector.broadcast %16 : f32 to vector<2x1xf32>
    %18 = arith.addf %15, %17 : vector<2x1xf32>
    %c0_9 = arith.constant 0 : index
    %c0_10 = arith.constant 0 : index
    %19 = vector.load %arg4[%c0_9, %c0_10] : memref<2x1xf32, #tpu.memory_space<vmem>>, vector<2x1xf32>
    tpu.vector_store %arg4[%c0_9, %c0_10], %18 {strides = array<i32>} : memref<2x1xf32, #tpu.memory_space<vmem>>, vector<2x1xf32>,
    return
  }
}

</mosaic_0001>

<llo_original>
// kernel: _net_forward.1
$region0: #{_net_forward.1}
  #allocation0 [shape = 'u32[]', space=smem, size = 0x4, offset = 0x4, fixed_abs, tag = 'smem constant byte address 0x4 - core index']
  #allocation1 [shape = 'u32[144,128]{1,0:T(1,128)}', space=vmem, size = 0x12000, scoped, tag = 'internal scratch']
  #allocation2 [shape = 'f32[1]{0:T(128)S(6)}', space=smem, size = 0x200, scoped, tag = 'scoped memory for _net_forward.1']
  %s0 = inlined_call_operand.vmem [shape: f32[20,16], index: 0, kind: input, shape index: {}]
  %s1 = inlined_call_operand.vmem [shape: f32[32,16], index: 1, kind: input, shape index: {}]
  %s2 = inlined_call_operand.vmem [shape: f32[16,2], index: 2, kind: input, shape index: {}]
  %s3 = inlined_call_operand.<no memory space> [shape: f32[1], index: 3, kind: input, shape index: {}]
  %s4 = inlined_call_operand.vmem [shape: f32[2,1], index: 4, kind: output, shape index: {}]
  %s5 = sld [smem:[#allocation0]]
  $region26: #{_net_forward.1} parent=0
    _
  %s7 = ssub.s32 1, %s5
  %s8 = scalar_select 0, %s7, %s5
  %9 = sst [smem:[#allocation2]] %s3
  // Predicated region
  $region2: #{_net_forward.1} parent=0 // pred_check
    _
  $region3: #{_net_forward.1} parent=0 // pred_check_branch
    %11 = sbr.rel (0) target = $region5
  $region4: #{_net_forward.1} parent=0 // pred_region
    _
  $region5: #{_net_forward.1} parent=0 // pred_fallthru
    _
  // Predicated region
  $region6: #{_net_forward.1} parent=0 // pred_check
    _
  $region7: #{_net_forward.1} parent=0 // pred_check_branch
    %13 = sbr.rel (0) target = $region9
  $region8: #{_net_forward.1} parent=0 // pred_region
    _
  $region9: #{_net_forward.1} parent=0 // pred_fallthru
    _
  // Predicated region
  $region10: #{_net_forward.1} parent=0 // pred_check
    _
  $region11: #{_net_forward.1} parent=0 // pred_check_branch
    %15 = sbr.rel (0) target = $region13
  $region12: #{_net_forward.1} parent=0 // pred_region
    _
  $region13: #{_net_forward.1} parent=0 // pred_fallthru
    _
  // Predicated region
  $region14: #{_net_forward.1} parent=0 // pred_check
    _
  $region15: #{_net_forward.1} parent=0 // pred_check_branch
    %17 = sbr.rel (0) target = $region17
  $region16: #{_net_forward.1} parent=0 // pred_region
    _
  $region17: #{_net_forward.1} parent=0 // pred_fallthru
    _
  %v18 = vld [vmem:[%s0] sm:$0xff]
  %v19 = vld [vmem:[%s0 + $0x8] sm:$0xff]
  %v20 = vld [vmem:[%s0 + $0x10] sm:$0xf]
  %v21 = vld [vmem:[%s1] sm:$0xff]
  %v22 = vld [vmem:[%s1 + $0x8] sm:$0xff]
  %v23 = vld [vmem:[%s1 + $0x10] sm:$0xff]
  %v24 = vld [vmem:[%s1 + $0x18] sm:$0xff]
  %vm25 = vcmask 130048
  %v27 = vsel %vm25, %v18, 0
  %v30 = vsel %vm25, %v19, 0
  %32 = vmatprep.subr.mxu0 0.0
  %33 = vmatpush1.msra.mxu0 0.0
  %34 = vmatprep.subr.mxu0 0.0
  %35 = vmatpush1.msra.mxu0 0.0
  %36 = vmatprep.subr.mxu0 0.0
  %37 = vmatpush1.msra.mxu0 0.0
  %38 = vmatprep.subr.mxu0 0.0
  %39 = vmatpush1.msra.mxu0 0.0
  %40 = vmatprep.subr.mxu0 0.0
  %41 = vmatpush1.msra.mxu0 0.0
  %42 = vmatprep.subr.mxu0 0.0
  %43 = vmatpush1.msra.mxu0 0.0
  %44 = vmatprep.subr.mxu0 0.0
  %45 = vmatpush1.msra.mxu0 0.0
  %46 = vmatprep.subr.mxu0 0.0
  %47 = vmatpush1.msra.mxu0 0.0
  %48 = vmatprep.subr.mxu0 0.0
  %49 = vmatpush1.msra.mxu0 0.0
  %50 = vmatprep.subr.mxu0 0.0
  %51 = vmatpush1.msra.mxu0 0.0
  %52 = vmatprep.subr.mxu0 0.0
  %53 = vmatpush1.msra.mxu0 0.0
  %54 = vmatprep.subr.mxu0 0.0
  %55 = vmatpush1.msra.mxu0 0.0
  %56 = vmatprep.subr.mxu0 0.0
  %57 = vmatpush1.msra.mxu0 0.0
  %58 = vmatprep.subr.mxu0 0.0
  %59 = vmatpush1.msra.mxu0 0.0
  %60 = vmatprep.subr.mxu0 0.0
  %61 = vmatpush1.msra.mxu0 %v22
  %62 = vmatprep.subr.mxu0 0.0
  %63 = vmatpush1.msra.mxu0 %v21
  %64 = vmatprep.subr.mxu0 0.0
  %65 = vmatpush2.msra.mxu0 0.0
  %66 = vmatprep.subr.mxu0 0.0
  %67 = vmatpush2.msra.mxu0 0.0
  %68 = vmatprep.subr.mxu0 0.0
  %69 = vmatpush2.msra.mxu0 0.0
  %70 = vmatprep.subr.mxu0 0.0
  %71 = vmatpush2.msra.mxu0 0.0
  %72 = vmatprep.subr.mxu0 0.0
  %73 = vmatpush2.msra.mxu0 0.0
  %74 = vmatprep.subr.mxu0 0.0
  %75 = vmatpush2.msra.mxu0 0.0
  %76 = vmatprep.subr.mxu0 0.0
  %77 = vmatpush2.msra.mxu0 0.0
  %78 = vmatprep.subr.mxu0 0.0
  %79 = vmatpush2.msra.mxu0 0.0
  %80 = vmatprep.subr.mxu0 0.0
  %81 = vmatpush2.msra.mxu0 0.0
  %82 = vmatprep.subr.mxu0 0.0
  %83 = vmatpush2.msra.mxu0 0.0
  %84 = vmatprep.subr.mxu0 0.0
  %85 = vmatpush2.msra.mxu0 0.0
  %86 = vmatprep.subr.mxu0 0.0
  %87 = vmatpush2.msra.mxu0 0.0
  %88 = vmatprep.subr.mxu0 0.0
  %89 = vmatpush2.msra.mxu0 0.0
  %90 = vmatprep.subr.mxu0 0.0
  %91 = vmatpush2.msra.mxu0 0.0
  %92 = vmatprep.subr.mxu0 0.0
  %93 = vmatpush2.msra.mxu0 0.0
  %94 = vmatprep.subr.mxu0 0.0
  %95 = vmatpush2.msra.mxu0 0.0
  %96 = vmatprep.mubr.f32.mxu0 0.0
  %97 = vmatmul.mubr.f32.gmra.mxu0 %v27
  %v98 = vpop.f32.mrf.mxu0
  %v99 = vadd.f32 %v23, %v98
  %v100 = vpop.f32.mrf.mxu0
  %101 = vmatprep.mubr.f32.mxu0 0.0
  %102 = vmatmul.mubr.f32.gmra.mxu0 %v30
  %v103 = vpop.f32.mrf.mxu0
  %v104 = vadd.f32 %v24, %v103
  %v105 = vpop.f32.mrf.mxu0
  %106 = vdwg.mxu0
  %v107 = vmax.f32 %v99, 0.0
  %v108 = vmax.f32 %v104, 0.0
  %v109 = vld [vmem:[%s2] sm:$0xff]
  %v110 = vld [vmem:[%s2 + $0x8] sm:$0xff]
  %v112 = vsel %vm25, %v107, 0
  %v115 = vsel %vm25, %v108, 0
  %117 = vmatprep.subr.mxu0 0.0
  %118 = vmatpush1.msra.mxu0 0.0
  %119 = vmatprep.subr.mxu0 0.0
  %120 = vmatpush1.msra.mxu0 0.0
  %121 = vmatprep.subr.mxu0 0.0
  %122 = vmatpush1.msra.mxu0 0.0
  %123 = vmatprep.subr.mxu0 0.0
  %124 = vmatpush1.msra.mxu0 0.0
  %125 = vmatprep.subr.mxu0 0.0
  %126 = vmatpush1.msra.mxu0 0.0
  %127 = vmatprep.subr.mxu0 0.0
  %128 = vmatpush1.msra.mxu0 0.0
  %129 = vmatprep.subr.mxu0 0.0
  %130 = vmatpush1.msra.mxu0 0.0
  %131 = vmatprep.subr.mxu0 0.0
  %132 = vmatpush1.msra.mxu0 0.0
  %133 = vmatprep.subr.mxu0 0.0
  %134 = vmatpush1.msra.mxu0 0.0
  %135 = vmatprep.subr.mxu0 0.0
  %136 = vmatpush1.msra.mxu0 0.0
  %137 = vmatprep.subr.mxu0 0.0
  %138 = vmatpush1.msra.mxu0 0.0
  %139 = vmatprep.subr.mxu0 0.0
  %140 = vmatpush1.msra.mxu0 0.0
  %141 = vmatprep.subr.mxu0 0.0
  %142 = vmatpush1.msra.mxu0 0.0
  %143 = vmatprep.subr.mxu0 0.0
  %144 = vmatpush1.msra.mxu0 0.0
  %145 = vmatprep.subr.mxu0 0.0
  %146 = vmatpush1.msra.mxu0 %v110
  %147 = vmatprep.subr.mxu0 0.0
  %148 = vmatpush1.msra.mxu0 %v109
  %149 = vmatprep.subr.mxu0 0.0
  %150 = vmatpush2.msra.mxu0 0.0
  %151 = vmatprep.subr.mxu0 0.0
  %152 = vmatpush2.msra.mxu0 0.0
  %153 = vmatprep.subr.mxu0 0.0
  %154 = vmatpush2.msra.mxu0 0.0
  %155 = vmatprep.subr.mxu0 0.0
  %156 = vmatpush2.msra.mxu0 0.0
  %157 = vmatprep.subr.mxu0 0.0
  %158 = vmatpush2.msra.mxu0 0.0
  %159 = vmatprep.subr.mxu0 0.0
  %160 = vmatpush2.msra.mxu0 0.0
  %161 = vmatprep.subr.mxu0 0.0
  %162 = vmatpush2.msra.mxu0 0.0
  %163 = vmatprep.subr.mxu0 0.0
  %164 = vmatpush2.msra.mxu0 0.0
  %165 = vmatprep.subr.mxu0 0.0
  %166 = vmatpush2.msra.mxu0 0.0
  %167 = vmatprep.subr.mxu0 0.0
  %168 = vmatpush2.msra.mxu0 0.0
  %169 = vmatprep.subr.mxu0 0.0
  %170 = vmatpush2.msra.mxu0 0.0
  %171 = vmatprep.subr.mxu0 0.0
  %172 = vmatpush2.msra.mxu0 0.0
  %173 = vmatprep.subr.mxu0 0.0
  %174 = vmatpush2.msra.mxu0 0.0
  %175 = vmatprep.subr.mxu0 0.0
  %176 = vmatpush2.msra.mxu0 0.0
  %177 = vmatprep.subr.mxu0 0.0
  %178 = vmatpush2.msra.mxu0 0.0
  %179 = vmatprep.subr.mxu0 0.0
  %180 = vmatpush2.msra.mxu0 0.0
  %181 = vmatprep.mubr.f32.mxu0 0.0
  %182 = vmatmul.mubr.f32.gmra.mxu0 %v112
  %v183 = vpop.f32.mrf.mxu0
  %v184 = vadd.f32 0.0, %v183
  %v185 = vpop.f32.mrf.mxu0
  %186 = vmatprep.mubr.f32.mxu0 0.0
  %187 = vmatmul.mubr.f32.gmra.mxu0 %v115
  %v188 = vpop.f32.mrf.mxu0
  %v189 = vadd.f32 0.0, %v188
  %v190 = vpop.f32.mrf.mxu0
  %191 = vdwg.mxu0
  %v193 = vsel %vm25, %v20, 0
  %195 = vmatprep.subr.mxu0 0.0
  %196 = vmatpush1.msra.mxu0 0.0
  %197 = vmatprep.subr.mxu0 0.0
  %198 = vmatpush1.msra.mxu0 0.0
  %199 = vmatprep.subr.mxu0 0.0
  %200 = vmatpush1.msra.mxu0 0.0
  %201 = vmatprep.subr.mxu0 0.0
  %202 = vmatpush1.msra.mxu0 0.0
  %203 = vmatprep.subr.mxu0 0.0
  %204 = vmatpush1.msra.mxu0 0.0
  %205 = vmatprep.subr.mxu0 0.0
  %206 = vmatpush1.msra.mxu0 0.0
  %207 = vmatprep.subr.mxu0 0.0
  %208 = vmatpush1.msra.mxu0 0.0
  %209 = vmatprep.subr.mxu0 0.0
  %210 = vmatpush1.msra.mxu0 0.0
  %211 = vmatprep.subr.mxu0 0.0
  %212 = vmatpush1.msra.mxu0 0.0
  %213 = vmatprep.subr.mxu0 0.0
  %214 = vmatpush1.msra.mxu0 0.0
  %215 = vmatprep.subr.mxu0 0.0
  %216 = vmatpush1.msra.mxu0 0.0
  %217 = vmatprep.subr.mxu0 0.0
  %218 = vmatpush1.msra.mxu0 0.0
  %219 = vmatprep.subr.mxu0 0.0
  %220 = vmatpush1.msra.mxu0 0.0
  %221 = vmatprep.subr.mxu0 0.0
  %222 = vmatpush1.msra.mxu0 0.0
  %223 = vmatprep.subr.mxu0 0.0
  %224 = vmatpush1.msra.mxu0 %v189
  %225 = vmatprep.subr.mxu0 0.0
  %226 = vmatpush1.msra.mxu0 %v184
  %227 = vmatprep.subr.mxu0 0.0
  %228 = vmatpush2.msra.mxu0 0.0
  %229 = vmatprep.subr.mxu0 0.0
  %230 = vmatpush2.msra.mxu0 0.0
  %231 = vmatprep.subr.mxu0 0.0
  %232 = vmatpush2.msra.mxu0 0.0
  %233 = vmatprep.subr.mxu0 0.0
  %234 = vmatpush2.msra.mxu0 0.0
  %235 = vmatprep.subr.mxu0 0.0
  %236 = vmatpush2.msra.mxu0 0.0
  %237 = vmatprep.subr.mxu0 0.0
  %238 = vmatpush2.msra.mxu0 0.0
  %239 = vmatprep.subr.mxu0 0.0
  %240 = vmatpush2.msra.mxu0 0.0
  %241 = vmatprep.subr.mxu0 0.0
  %242 = vmatpush2.msra.mxu0 0.0
  %243 = vmatprep.subr.mxu0 0.0
  %244 = vmatpush2.msra.mxu0 0.0
  %245 = vmatprep.subr.mxu0 0.0
  %246 = vmatpush2.msra.mxu0 0.0
  %247 = vmatprep.subr.mxu0 0.0
  %248 = vmatpush2.msra.mxu0 0.0
  %249 = vmatprep.subr.mxu0 0.0
  %250 = vmatpush2.msra.mxu0 0.0
  %251 = vmatprep.subr.mxu0 0.0
  %252 = vmatpush2.msra.mxu0 0.0
  %253 = vmatprep.subr.mxu0 0.0
  %254 = vmatpush2.msra.mxu0 0.0
  %255 = vmatprep.subr.mxu0 0.0
  %256 = vmatpush2.msra.mxu0 0.0
  %257 = vmatprep.subr.mxu0 0.0
  %258 = vmatpush2.msra.mxu0 0.0
  %259 = vmatprep.mubr.f32.mxu0 0.0
  %260 = vmatmul.mubr.f32.gmra.mxu0 %v193
  %v261 = vpop.f32.mrf.mxu0
  %v262 = vadd.f32 0.0, %v261
  %v263 = vpop.f32.mrf.mxu0
  %264 = vdwg.mxu0
  %v266 = vrot.slane %v262, 2
  %267 = vrot.lane.b32.xlu0 %v266, 127
  %v268 = vpop.permute.xlu0 %267
  %v270 = vadd.f32 %v262, %v268
  %s271 = sld [smem:[#allocation2]]
  %v272 = vstv %s271
  %v273 = vadd.f32 %v270, %v272
  %vm274 = vcmask 1024
  %275 = vst.msk [vmem:[%s4] sm:$0x3] %vm274, %v273
  // Predicated region
  $region18: #{_net_forward.1} parent=0 // pred_check
    _
  $region19: #{_net_forward.1} parent=0 // pred_check_branch
    %277 = sbr.rel (0) target = $region21
  $region20: #{_net_forward.1} parent=0 // pred_region
    _
  $region21: #{_net_forward.1} parent=0 // pred_fallthru
    _
  // Predicated region
  $region22: #{_net_forward.1} parent=0 // pred_check
    _
  $region23: #{_net_forward.1} parent=0 // pred_check_branch
    %279 = sbr.rel (0) target = $region25
  $region24: #{_net_forward.1} parent=0 // pred_region
    _
  $region25: #{_net_forward.1} parent=0 // pred_fallthru
    _

</llo_original>
